<compile_context>
chip_gen: v7x
topology: tpu7x:2x2x1
jax: 0.10.0
libtpu: 0.0.40
codegen_flags: <defaults>
</compile_context>

<pallas_src>
import functools
import math

import jax
import jax.numpy as jnp
from jax import lax
from jax.experimental import pallas as pl
from jax.experimental.pallas import tpu as pltpu

_RCE_CLAMP = -math.log(1e-7)   # clamp(softmax, 1e-7, 1.0) at the (single) target class
_NEG_FILL = -1e30              # class-mask fill: exp(fill - row_max) underflows to 0.0


def _round_up(x, m):
    return ((x + m - 1) // m) * m


def _cdiv(a, b):
    return -(-a // b)


def _vmem_capacity_bytes():
    try:
        return int(pltpu.get_tpu_info().vmem_capacity_bytes)
    except Exception:
        return 64 << 20           # conservative fallback (v7x per-TC VMEM)


def _tensorcores_per_chip():
    try:
        kind = jax.devices()[0].device_kind.lower()
    except Exception:
        return 1
    if "v7" in kind or "7x" in kind:
        return 2                  # v7x: 2 TensorCores per chip
    return 1                      # v5e / v6e: single TensorCore


def _sce_kernel(logits_ref, tgt_ref, out_ref, m_ref, l_ref, xt_ref, acc_ref, *,
                alpha, beta, n_valid, n_classes, tile_n, c_chunk, n_steps,
                need_row_mask, need_col_mask):
    c = pl.program_id(0)          # batch shard (megacore) axis
    s = pl.program_id(1)          # batch tiles within this shard
    k = pl.program_id(2)          # class chunks (online-logsumexp reduction axis)
    c_last = pl.num_programs(2) - 1

    @pl.when(jnp.logical_and(s == 0, k == 0))
    def _():
        acc_ref[...] = jnp.zeros_like(acc_ref)

    @pl.when(k == 0)
    def _():
        m_ref[...] = jnp.full_like(m_ref, _NEG_FILL)
        l_ref[...] = jnp.zeros_like(l_ref)
        xt_ref[...] = jnp.zeros_like(xt_ref)

    x = logits_ref[...].astype(jnp.float32)              # (tn, cc) upcast under DMA
    t = tgt_ref[...]                                     # (tn, 1) int32
    tn, cc = x.shape

    col_ids = k * c_chunk + lax.broadcasted_iota(jnp.int32, (tn, cc), 1)
    if need_col_mask:             # only when the last class chunk is partial (static)
        x = jnp.where(col_ids < n_classes, x, jnp.float32(_NEG_FILL))

    # target logit: exactly one class chunk contributes; masked select-sum, no one-hot.
    xt_ref[...] += jnp.sum(jnp.where(col_ids == t, x, 0.0), axis=-1, keepdims=True)

    # online (flash-style) logsumexp across class chunks
    m_prev = m_ref[...]
    m_new = jnp.maximum(m_prev, jnp.max(x, axis=-1, keepdims=True))
    l_ref[...] = (l_ref[...] * jnp.exp(m_prev - m_new)
                  + jnp.sum(jnp.exp(x - m_new), axis=-1, keepdims=True))
    m_ref[...] = m_new

    @pl.when(k == c_last)
    def _():
        ce = m_ref[...] + jnp.log(l_ref[...]) - xt_ref[...]      # -log_softmax[target]
        rce = jnp.minimum(ce, jnp.float32(_RCE_CLAMP))           # clamp(softmax,1e-7,1)
        fused = jnp.float32(alpha) * ce + jnp.float32(beta) * rce
        if need_row_mask:         # only when the grid over-covers the batch (static)
            row_ids = ((c * n_steps + s) * tile_n
                       + lax.broadcasted_iota(jnp.int32, (tn, 1), 0))
            fused = jnp.where(row_ids < n_valid, fused, 0.0)     # select => NaN-safe
        acc_ref[...] += fused

    @pl.when(jnp.logical_and(s == pl.num_programs(1) - 1, k == c_last))
    def _():
        out_ref[...] = jnp.sum(acc_ref[...], keepdims=True)      # (1,1) per-core partial


def symmetric_cross_entropy(logits, targets, *, alpha=0.1, beta=1.0,
                            max_class_chunk=None):
    """logits: (N, C) float (any dtype), targets: (N,) int. Scalar mean SCE loss."""
    N, C = logits.shape
    in_bytes = jnp.dtype(logits.dtype).itemsize

    vmem_cap = _vmem_capacity_bytes()
    # Budget for streamed logits (double-buffered) + in-kernel f32 temporaries:
    # ~56 MiB on 128-MiB v5e/v6e, ~24 MiB on 64-MiB v7x.
    budget = max(4 << 20, vmem_cap // 2 - (8 << 20))
    per_col = 2 * in_bytes + 3 * 4      # dbl-buffered input + ~3 f32 temps, per row*col
    narrow = 6 * 128 * 4                # (tn,1) buffers are lane-padded to 128

    def rows_for(chunk):
        cc_pad = _round_up(chunk, 128)
        r = budget // (cc_pad * per_col + narrow)
        return max(8, (r // 8) * 8)

    # ---- choose the class chunk --------------------------------------------------
    if max_class_chunk is not None and max_class_chunk < C:
        c_chunk = max(128, (min(max_class_chunk, C) // 128) * 128)
        if c_chunk >= C:
            c_chunk = C
    elif rows_for(C) >= min(128, _round_up(N, 8)):
        c_chunk = C                     # whole class dim fits comfortably in the budget
    else:
        target_tn = 256                 # keep DMA tiles large for huge vocabularies
        c_chunk = (budget // (target_tn * per_col)) // 128 * 128
        c_chunk = max(128, min(c_chunk, _round_up(C, 128)))
        if c_chunk >= C:
            c_chunk = C

    # ---- choose the batch tile ---------------------------------------------------
    tn = min(rows_for(c_chunk), 1024, _round_up(N, 8))
    tn = max(8, (tn // 8) * 8)

    n_cores = _tensorcores_per_chip()
    if N < 2 * tn:                      # not enough rows to feed two TensorCores
        n_cores = 1
    row_blocks = _cdiv(N, tn)
    n_steps = _cdiv(row_blocks, n_cores)
    c_steps = _cdiv(C, c_chunk)
    last_block = row_blocks - 1         # clamp redundant trailing blocks in-bounds

    tgt = targets.astype(jnp.int32).reshape(N, 1)

    kernel = functools.partial(
        _sce_kernel, alpha=float(alpha), beta=float(beta),
        n_valid=N, n_classes=C, tile_n=tn, c_chunk=c_chunk, n_steps=n_steps,
        need_row_mask=(n_cores * n_steps * tn) != N,
        need_col_mask=(C % c_chunk) != 0)

    # Exact VMEM requirement of the chosen tiling (+ headroom for Mosaic scratch).
    cc_pad = _round_up(c_chunk, 128)
    req = (2 * tn * cc_pad * in_bytes   # double-buffered logits tiles (native dtype)
           + 3 * tn * cc_pad * 4        # f32 upcast / exp temporaries
           + 6 * tn * 128 * 4)          # targets (x2) + m/l/xt/acc scratch
    vmem_limit = int(min(vmem_cap, max(16 << 20, req + (4 << 20))))

    partials = pl.pallas_call(
        kernel,
        out_shape=jax.ShapeDtypeStruct((n_cores, 1), jnp.float32),
        grid_spec=pltpu.PrefetchScalarGridSpec(
            num_scalar_prefetch=0,
            grid=(n_cores, n_steps, c_steps),
            in_specs=[
                pl.BlockSpec((tn, c_chunk),
                             lambda c, s, k: (jnp.minimum(c * n_steps + s, last_block), k)),
                pl.BlockSpec((tn, 1),
                             lambda c, s, k: (jnp.minimum(c * n_steps + s, last_block), 0)),
            ],
            out_specs=pl.BlockSpec((1, 1), lambda c, s, k: (c, 0)),
            scratch_shapes=[pltpu.VMEM((tn, 1), jnp.float32)] * 4,
        ),
        compiler_params=pltpu.CompilerParams(
            dimension_semantics=("parallel", "arbitrary", "arbitrary"),
            vmem_limit_bytes=vmem_limit),
    )(logits, tgt)

    return jnp.sum(partials) / jnp.float32(N)


def _reference(logits, targets, alpha=0.1, beta=1.0):
    # pure-JAX reference matching the PyTorch module (clamp on softmax, reduction='mean')
    x = logits.astype(jnp.float32)
    N, C = x.shape
    onehot = jax.nn.one_hot(targets, C, dtype=jnp.float32)
    logp = jax.nn.log_softmax(x, axis=1)
    ce = -jnp.sum(onehot * logp, axis=1).mean()
    sm = jnp.clip(jax.nn.softmax(x, axis=1), 1e-7, 1.0)
    rce = jnp.sum(-onehot * jnp.log(sm), axis=1).mean()
    return alpha * ce + beta * rce


if __name__ == "__main__":
    key = jax.random.PRNGKey(0)
    k1, k2, k3, k4 = jax.random.split(key, 4)

    # case 1: batch 30 (partial 8-row tile), 200 classes (non-128-multiple, single chunk)
    N1, C1 = 30, 200
    logits1 = jax.random.normal(k1, (N1, C1), dtype=jnp.float32) * 3.0
    targets1 = jax.random.randint(k2, (N1,), 0, C1, dtype=jnp.int32)
    loss1 = jax.block_until_ready(symmetric_cross_entropy(logits1, targets1,
                                                          alpha=0.1, beta=1.0))
    ref1 = _reference(logits1, targets1, alpha=0.1, beta=1.0)
    assert jnp.allclose(loss1, ref1, rtol=1e-4, atol=1e-4), (loss1, ref1)

    # case 2: same data through the class-chunked online-logsumexp path (partial chunk)
    loss2 = jax.block_until_ready(symmetric_cross_entropy(logits1, targets1,
                                                          alpha=0.1, beta=1.0,
                                                          max_class_chunk=128))
    assert jnp.allclose(loss2, ref1, rtol=1e-4, atol=1e-4), (loss2, ref1)

    # case 3: bf16 logits streamed in native dtype (no wrapper-side upcast or padding)
    N3, C3 = 64, 384
    logits3 = (jax.random.normal(k3, (N3, C3), dtype=jnp.float32) * 3.0).astype(jnp.bfloat16)
    targets3 = jax.random.randint(k4, (N3,), 0, C3, dtype=jnp.int32)
    loss3 = jax.block_until_ready(symmetric_cross_entropy(logits3, targets3,
                                                          alpha=0.1, beta=1.0))
    ref3 = _reference(logits3, targets3, alpha=0.1, beta=1.0)
    assert jnp.allclose(loss3, ref3, rtol=1e-4, atol=1e-4), (loss3, ref3)

    print("KERNEL_OK")
</pallas_src>

<mosaic_0001>
module attributes {stable_mosaic.version = 11 : i64} {
  func.func @_sce_kernel(%arg0: i32, %arg1: i32, %arg2: i32, %arg3: memref<32x200xf32, #tpu.memory_space<vmem>>, %arg4: memref<32x1xi32, #tpu.memory_space<vmem>>, %arg5: memref<1x1xf32, #tpu.memory_space<vmem>>, %arg6: memref<32x1xf32, #tpu.memory_space<vmem>>, %arg7: memref<32x1xf32, #tpu.memory_space<vmem>>, %arg8: memref<32x1xf32, #tpu.memory_space<vmem>>, %arg9: memref<32x1xf32, #tpu.memory_space<vmem>>) attributes {dimension_semantics = [#tpu.dimension_semantics<parallel>, #tpu.dimension_semantics<arbitrary>, #tpu.dimension_semantics<arbitrary>], iteration_bounds = array<i64: 1, 1, 1>, scalar_prefetch = 0 : i64, scratch_operands = 4 : i64, tpu.core_type = #tpu.core_type<tc>, window_params = [{transform_indices = @transform_0, window_bounds = array<i64: 32, 200>}, {transform_indices = @transform_1, window_bounds = array<i64: 32, 1>}, {transform_indices = @transform_2, window_bounds = array<i64: 1, 1>}]} {
    %c0_i32 = arith.constant 0 : i32
    %0 = arith.cmpi eq, %arg1, %c0_i32 : i32
    %c0_i32_0 = arith.constant 0 : i32
    %1 = arith.cmpi eq, %arg2, %c0_i32_0 : i32
    %2 = arith.andi %0, %1 : i1
    %3 = arith.extui %2 : i1 to i32
    %c0_i32_1 = arith.constant 0 : i32
    %4 = arith.cmpi ne, %3, %c0_i32_1 : i32
    scf.if %4 {
      %cst_27 = arith.constant 0.000000e+00 : f32
      %47 = vector.broadcast %cst_27 : f32 to vector<32x1xf32>
      %c0_28 = arith.constant 0 : index
      %c0_29 = arith.constant 0 : index
      %48 = vector.load %arg9[%c0_28, %c0_29] : memref<32x1xf32, #tpu.memory_space<vmem>>, vector<32x1xf32>
      tpu.vector_store %arg9[%c0_28, %c0_29], %47 {strides = array<i32>} : memref<32x1xf32, #tpu.memory_space<vmem>>, vector<32x1xf32>,
    } else {
    }
    %c0_i32_2 = arith.constant 0 : i32
    %5 = arith.cmpi eq, %arg2, %c0_i32_2 : i32
    %6 = arith.extui %5 : i1 to i32
    %c0_i32_3 = arith.constant 0 : i32
    %7 = arith.cmpi ne, %6, %c0_i32_3 : i32
    scf.if %7 {
      %cst_27 = arith.constant -1.000000e+30 : f32
      %47 = vector.broadcast %cst_27 : f32 to vector<32x1xf32>
      %c0_28 = arith.constant 0 : index
      %c0_29 = arith.constant 0 : index
      %48 = vector.load %arg6[%c0_28, %c0_29] : memref<32x1xf32, #tpu.memory_space<vmem>>, vector<32x1xf32>
      tpu.vector_store %arg6[%c0_28, %c0_29], %47 {strides = array<i32>} : memref<32x1xf32, #tpu.memory_space<vmem>>, vector<32x1xf32>,
      %cst_30 = arith.constant 0.000000e+00 : f32
      %49 = vector.broadcast %cst_30 : f32 to vector<32x1xf32>
      %c0_31 = arith.constant 0 : index
      %c0_32 = arith.constant 0 : index
      %50 = vector.load %arg7[%c0_31, %c0_32] : memref<32x1xf32, #tpu.memory_space<vmem>>, vector<32x1xf32>
      tpu.vector_store %arg7[%c0_31, %c0_32], %49 {strides = array<i32>} : memref<32x1xf32, #tpu.memory_space<vmem>>, vector<32x1xf32>,
      %cst_33 = arith.constant 0.000000e+00 : f32
      %51 = vector.broadcast %cst_33 : f32 to vector<32x1xf32>
      %c0_34 = arith.constant 0 : index
      %c0_35 = arith.constant 0 : index
      %52 = vector.load %arg8[%c0_34, %c0_35] : memref<32x1xf32, #tpu.memory_space<vmem>>, vector<32x1xf32>
      tpu.vector_store %arg8[%c0_34, %c0_35], %51 {strides = array<i32>} : memref<32x1xf32, #tpu.memory_space<vmem>>, vector<32x1xf32>,
    } else {
    }
    %c0 = arith.constant 0 : index
    %c0_4 = arith.constant 0 : index
    %8 = vector.load %arg3[%c0, %c0_4] : memref<32x200xf32, #tpu.memory_space<vmem>>, vector<32x200xf32>
    %c0_5 = arith.constant 0 : index
    %c0_6 = arith.constant 0 : index
    %9 = vector.load %arg4[%c0_5, %c0_6] : memref<32x1xi32, #tpu.memory_space<vmem>>, vector<32x1xi32>
    %c200_i32 = arith.constant 200 : i32
    %10 = arith.muli %arg2, %c200_i32 : i32
    %11 = tpu.iota {dimensions = array<i32: 1>} : vector<32x200xi32>
    %12 = vector.broadcast %10 : i32 to vector<32x200xi32>
    %13 = arith.addi %12, %11 : vector<32x200xi32>
    %c0_7 = arith.constant 0 : index
    %c0_8 = arith.constant 0 : index
    %14 = vector.load %arg8[%c0_7, %c0_8] : memref<32x1xf32, #tpu.memory_space<vmem>>, vector<32x1xf32>
    %15 = vector.broadcast %9 : vector<32x1xi32> to vector<32x200xi32>
    %16 = arith.cmpi eq, %13, %15 : vector<32x200xi32>
    %cst = arith.constant 0.000000e+00 : f32
    %17 = vector.broadcast %cst : f32 to vector<32x200xf32>
    %18 = arith.select %16, %8, %17 : vector<32x200xi1>, vector<32x200xf32>
    %cst_9 = arith.constant dense<0.000000e+00> : vector<32xf32>
    %19 = vector.multi_reduction <add>, %18, %cst_9 [1] : vector<32x200xf32> to vector<32xf32>
    %20 = vector.shape_cast %19 : vector<32xf32> to vector<32x1xf32>
    %21 = arith.addf %14, %20 : vector<32x1xf32>
    %c0_10 = arith.constant 0 : index
    %c0_11 = arith.constant 0 : index
    %22 = vector.load %arg8[%c0_10, %c0_11] : memref<32x1xf32, #tpu.memory_space<vmem>>, vector<32x1xf32>
    tpu.vector_store %arg8[%c0_10, %c0_11], %21 {strides = array<i32>} : memref<32x1xf32, #tpu.memory_space<vmem>>, vector<32x1xf32>,
    %c0_12 = arith.constant 0 : index
    %c0_13 = arith.constant 0 : index
    %23 = vector.load %arg6[%c0_12, %c0_13] : memref<32x1xf32, #tpu.memory_space<vmem>>, vector<32x1xf32>
    %cst_14 = arith.constant dense<0xFF800000> : vector<32xf32>
    %24 = vector.multi_reduction <maximumf>, %8, %cst_14 [1] : vector<32x200xf32> to vector<32xf32>
    %25 = vector.shape_cast %24 : vector<32xf32> to vector<32x1xf32>
    %26 = arith.maximumf %23, %25 : vector<32x1xf32>
    %c0_15 = arith.constant 0 : index
    %c0_16 = arith.constant 0 : index
    %27 = vector.load %arg7[%c0_15, %c0_16] : memref<32x1xf32, #tpu.memory_space<vmem>>, vector<32x1xf32>
    %28 = arith.subf %23, %26 : vector<32x1xf32>
    %29 = math.exp %28 : vector<32x1xf32>
    %30 = arith.mulf %27, %29 : vector<32x1xf32>
    %31 = vector.broadcast %26 : vector<32x1xf32> to vector<32x200xf32>
    %32 = arith.subf %8, %31 : vector<32x200xf32>
    %33 = math.exp %32 : vector<32x200xf32>
    %cst_17 = arith.constant dense<0.000000e+00> : vector<32xf32>
    %34 = vector.multi_reduction <add>, %33, %cst_17 [1] : vector<32x200xf32> to vector<32xf32>
    %35 = vector.shape_cast %34 : vector<32xf32> to vector<32x1xf32>
    %36 = arith.addf %30, %35 : vector<32x1xf32>
    %c0_18 = arith.constant 0 : index
    %c0_19 = arith.constant 0 : index
    %37 = vector.load %arg7[%c0_18, %c0_19] : memref<32x1xf32, #tpu.memory_space<vmem>>, vector<32x1xf32>
    tpu.vector_store %arg7[%c0_18, %c0_19], %36 {strides = array<i32>} : memref<32x1xf32, #tpu.memory_space<vmem>>, vector<32x1xf32>,
    %c0_20 = arith.constant 0 : index
    %c0_21 = arith.constant 0 : index
    %38 = vector.load %arg6[%c0_20, %c0_21] : memref<32x1xf32, #tpu.memory_space<vmem>>, vector<32x1xf32>
    tpu.vector_store %arg6[%c0_20, %c0_21], %26 {strides = array<i32>} : memref<32x1xf32, #tpu.memory_space<vmem>>, vector<32x1xf32>,
    %c0_i32_22 = arith.constant 0 : i32
    %39 = arith.cmpi eq, %arg2, %c0_i32_22 : i32
    %40 = arith.extui %39 : i1 to i32
    %c0_i32_23 = arith.constant 0 : i32
    %41 = arith.cmpi ne, %40, %c0_i32_23 : i32
    scf.if %41 {
      %c0_27 = arith.constant 0 : index
      %c0_28 = arith.constant 0 : index
      %47 = vector.load %arg6[%c0_27, %c0_28] : memref<32x1xf32, #tpu.memory_space<vmem>>, vector<32x1xf32>
      %c0_29 = arith.constant 0 : index
      %c0_30 = arith.constant 0 : index
      %48 = vector.load %arg7[%c0_29, %c0_30] : memref<32x1xf32, #tpu.memory_space<vmem>>, vector<32x1xf32>
      %49 = math.log %48 : vector<32x1xf32>
      %50 = arith.addf %47, %49 : vector<32x1xf32>
      %c0_31 = arith.constant 0 : index
      %c0_32 = arith.constant 0 : index
      %51 = vector.load %arg8[%c0_31, %c0_32] : memref<32x1xf32, #tpu.memory_space<vmem>>, vector<32x1xf32>
      %52 = arith.subf %50, %51 : vector<32x1xf32>
      %cst_33 = arith.constant 16.1180954 : f32
      %53 = vector.broadcast %cst_33 : f32 to vector<32x1xf32>
      %54 = arith.minimumf %52, %53 : vector<32x1xf32>
      %cst_34 = arith.constant 1.000000e-01 : f32
      %55 = vector.broadcast %cst_34 : f32 to vector<32x1xf32>
      %56 = arith.mulf %55, %52 : vector<32x1xf32>
      %cst_35 = arith.constant 1.000000e+00 : f32
      %57 = vector.broadcast %cst_35 : f32 to vector<32x1xf32>
      %58 = arith.mulf %57, %54 : vector<32x1xf32>
      %59 = arith.addf %56, %58 : vector<32x1xf32>
      %c1_i32 = arith.constant 1 : i32
      %60 = arith.muli %arg0, %c1_i32 : i32
      %61 = arith.addi %60, %arg1 : i32
      %c32_i32 = arith.constant 32 : i32
      %62 = arith.muli %61, %c32_i32 : i32
      %63 = tpu.iota {dimensions = array<i32: 0>} : vector<32x1xi32>
      %64 = vector.broadcast %62 : i32 to vector<32x1xi32>
      %65 = arith.addi %64, %63 : vector<32x1xi32>
      %c30_i32 = arith.constant 30 : i32
      %66 = vector.broadcast %c30_i32 : i32 to vector<32x1xi32>
      %67 = arith.cmpi slt, %65, %66 : vector<32x1xi32>
      %cst_36 = arith.constant 0.000000e+00 : f32
      %68 = vector.broadcast %cst_36 : f32 to vector<32x1xf32>
      %69 = arith.select %67, %59, %68 : vector<32x1xi1>, vector<32x1xf32>
      %c0_37 = arith.constant 0 : index
      %c0_38 = arith.constant 0 : index
      %70 = vector.load %arg9[%c0_37, %c0_38] : memref<32x1xf32, #tpu.memory_space<vmem>>, vector<32x1xf32>
      %71 = arith.addf %70, %69 : vector<32x1xf32>
      %c0_39 = arith.constant 0 : index
      %c0_40 = arith.constant 0 : index
      %72 = vector.load %arg9[%c0_39, %c0_40] : memref<32x1xf32, #tpu.memory_space<vmem>>, vector<32x1xf32>
      tpu.vector_store %arg9[%c0_39, %c0_40], %71 {strides = array<i32>} : memref<32x1xf32, #tpu.memory_space<vmem>>, vector<32x1xf32>,
    } else {
    }
    %c0_i32_24 = arith.constant 0 : i32
    %42 = arith.cmpi eq, %arg1, %c0_i32_24 : i32
    %c0_i32_25 = arith.constant 0 : i32
    %43 = arith.cmpi eq, %arg2, %c0_i32_25 : i32
    %44 = arith.andi %42, %43 : i1
    %45 = arith.extui %44 : i1 to i32
    %c0_i32_26 = arith.constant 0 : i32
    %46 = arith.cmpi ne, %45, %c0_i32_26 : i32
    scf.if %46 {
      %c0_27 = arith.constant 0 : index
      %c0_28 = arith.constant 0 : index
      %47 = vector.load %arg9[%c0_27, %c0_28] : memref<32x1xf32, #tpu.memory_space<vmem>>, vector<32x1xf32>
      %48 = vector.shape_cast %47 : vector<32x1xf32> to vector<1x32x1xf32>
      %cst_29 = arith.constant dense<0.000000e+00> : vector<1xf32>
      %49 = vector.multi_reduction <add>, %48, %cst_29 [1, 2] : vector<1x32x1xf32> to vector<1xf32>
      %50 = vector.shape_cast %49 : vector<1xf32> to vector<1x1x1xf32>
      %51 = vector.extract %50[0, 0, 0] : f32 from vector<1x1x1xf32>
      %52 = vector.broadcast %51 : f32 to vector<1x1xf32>
      %c0_30 = arith.constant 0 : index
      %c0_31 = arith.constant 0 : index
      %53 = vector.load %arg5[%c0_30, %c0_31] : memref<1x1xf32, #tpu.memory_space<vmem>>, vector<1x1xf32>
      tpu.vector_store %arg5[%c0_30, %c0_31], %52 {strides = array<i32>} : memref<1x1xf32, #tpu.memory_space<vmem>>, vector<1x1xf32>,
    } else {
    }
    return
  }
  func.func @transform_0(%arg0: i32, %arg1: i32, %arg2: i32) -> (i32, i32) {
    %c1_i32 = arith.constant 1 : i32
    %0 = arith.muli %arg0, %c1_i32 : i32
    %1 = arith.addi %0, %arg1 : i32
    %c0_i32 = arith.constant 0 : i32
    %2 = arith.minsi %1, %c0_i32 : i32
    %c0_i32_0 = arith.constant 0 : i32
    return %2, %arg2 : i32, i32
  }
  func.func @transform_1(%arg0: i32, %arg1: i32, %arg2: i32) -> (i32, i32) {
    %c1_i32 = arith.constant 1 : i32
    %0 = arith.muli %arg0, %c1_i32 : i32
    %1 = arith.addi %0, %arg1 : i32
    %c0_i32 = arith.constant 0 : i32
    %2 = arith.minsi %1, %c0_i32 : i32
    %c0_i32_0 = arith.constant 0 : i32
    %c0_i32_1 = arith.constant 0 : i32
    return %2, %c0_i32_0 : i32, i32
  }
  func.func @transform_2(%arg0: i32, %arg1: i32, %arg2: i32) -> (i32, i32) {
    %c0_i32 = arith.constant 0 : i32
    %c0_i32_0 = arith.constant 0 : i32
    return %arg0, %c0_i32 : i32, i32
  }
}

</mosaic_0001>

<llo_original>
// kernel: tpu_custom_call.1
$region0: #{tpu_custom_call.1}
  #allocation0 [shape = 'u32[]', space=smem, size = 0x4, offset = 0x4, fixed_abs, tag = 'smem constant byte address 0x4 - core index']
  #allocation1 [shape = 'u32[144,128]{1,0:T(1,128)}', space=vmem, size = 0x12000, scoped, tag = 'internal scratch']
  #allocation2 [shape = 'f32[32,1]{1,0:T(8,128)}', space=vmem, size = 0x4000, scoped, tag = 'scratch operand']
  #allocation3 [shape = 'f32[32,1]{1,0:T(8,128)}', space=vmem, size = 0x4000, scoped, tag = 'scratch operand']
  #allocation4 [shape = 'f32[32,1]{1,0:T(8,128)}', space=vmem, size = 0x4000, scoped, tag = 'scratch operand']
  #allocation5 [shape = 'f32[32,1]{1,0:T(8,128)}', space=vmem, size = 0x4000, scoped, tag = 'scratch operand']
  %s0 = inlined_call_operand.hbm [shape: f32[30,200], index: 0, kind: input, shape index: {}]
  %s1 = inlined_call_operand.vmem [shape: s32[30,1], index: 1, kind: input, shape index: {}]
  %s2 = inlined_call_operand.hbm [shape: f32[1,1], index: 2, kind: output, shape index: {}]
  %s3 = sld [smem:[#allocation0]]
  $region38: #{tpu_custom_call.1} parent=0
    _
  %s5 = ssub.s32 1, %s3
  %s6 = scalar_select 0, %s5, %s3
  $region1: #{tpu_custom_call.1} parent=0
    #allocation6 [shape = 'u8[32768]{0}', space=vmem, size = 0x8000, scoped, tag = 'input window, operand 0, single buffered']
    #allocation7 [shape = 's32[1]{0}', space=sflag, size = 0x4, scoped, tag = 'scoped memory for tpu_custom_call.1']
    #allocation8 [shape = 's32[1]{0}', space=sflag, size = 0x4, scoped, tag = 'scoped memory for tpu_custom_call.1']
    #allocation9 [shape = 'u8[512]{0}', space=vmem, size = 0x400, scoped, tag = 'output window, operand 0, single buffered']
    %7 = vsyncpa [#allocation7], 0
    %8 = vsyncpa [#allocation8], 0
    // Predicated region
    $region2: #{tpu_custom_call.1} parent=1 // pred_check
      _
    $region3: #{tpu_custom_call.1} parent=1 // pred_check_branch
      %10 = sbr.rel (0) target = $region5
    $region4: #{tpu_custom_call.1} parent=1 // pred_region
      %s11 = sadd.s32 0, 0
      %p12 = scmp.lt.s32.totalorder %s11, 0
      %s13 = scalar_select %p12, %s11, 0
      %s14 = smul.u32 4, %s13
      %s16 = ssub.s32 1024, 1024
      %17 = vsyncadd [#allocation7], %s16
      %s18 = smul.addr %s14, 2
      %s19 = smul.addr %s18, 128
      %s20 = scalar_lea.hbm %s0, %s19
      %s21 = sshll.u32 [#allocation6], 4
      %s22 = int_to_ptr.vmem [resolvable:$true] %s21
      %27 = dma.hbm_to_vmem [thread:$0]  %s20, 1024, %s22, [#allocation7], 256, 256, 16
    $region5: #{tpu_custom_call.1} parent=1 // pred_fallthru
      _
    // Predicated region
    $region6: #{tpu_custom_call.1} parent=1 // pred_check
      _
    $region7: #{tpu_custom_call.1} parent=1 // pred_check_branch
      %29 = sbr.rel (0) target = $region9
    $region8: #{tpu_custom_call.1} parent=1 // pred_region
      %s30 = sadd.s32 0, 0
      %p31 = scmp.lt.s32.totalorder %s30, 0
      %s32 = scalar_select %p31, %s30, 0
      %s33 = smul.u32 4, %s32
      %p34 = scmp.lt.s32.totalorder %s33, 3
      %s35 = scalar_select %p34, %s33, 3
      %s36 = smul.addr %s35, 8
      %s37 = scalar_lea.vmem %s1, %s36
      %s38 = sadd.s32 0, 0
      %p39 = scmp.lt.s32.totalorder %s38, 0
      %s40 = scalar_select %p39, %s38, 0
      %s41 = smul.u32 4, %s40
    $region9: #{tpu_custom_call.1} parent=1 // pred_fallthru
      _
    // Predicated region
    $region10: #{tpu_custom_call.1} parent=1 // pred_check
      _
    $region11: #{tpu_custom_call.1} parent=1 // pred_check_branch
      %43 = sbr.rel (0) target = $region13
    $region12: #{tpu_custom_call.1} parent=1 // pred_region
      %44 = dma.done [#allocation7], 1024
    $region13: #{tpu_custom_call.1} parent=1 // pred_fallthru
      _
    %s45 = sadd.s32 0, 0
    %p46 = scmp.lt.s32.totalorder %s45, 0
    %s47 = scalar_select %p46, %s45, 0
    %s48 = smul.u32 4, %s47
    %p49 = scmp.lt.s32.totalorder %s48, 3
    %s50 = scalar_select %p49, %s48, 3
    %s51 = smul.addr %s50, 8
    %s52 = scalar_lea.vmem %s1, %s51
    %s53 = sadd.s32 0, 0
    %p54 = scmp.lt.s32.totalorder %s53, 0
    %s55 = scalar_select %p54, %s53, 0
    %s56 = smul.u32 4, %s55
    %s57 = sadd.s32 0, 0
    %p58 = scmp.lt.s32.totalorder %s57, 0
    %s59 = scalar_select %p58, %s57, 0
    %s60 = smul.u32 4, %s59
    %p61 = scmp.lt.s32.totalorder %s60, 3
    %s62 = scalar_select %p61, %s60, 3
    %s63 = smul.addr %s62, 8
    %s64 = scalar_lea.vmem %s1, %s63
    %s65 = sadd.s32 0, 0
    %p66 = scmp.lt.s32.totalorder %s65, 0
    %s67 = scalar_select %p66, %s65, 0
    %s68 = smul.u32 4, %s67
    %p69 = scmp.eq.s32.totalorder 0, 0
    %p70 = scmp.eq.s32.totalorder 0, 0
    %p71 = pnand %p69, %p70
    %p72 = pneg %p71
    // Predicated region
    $region14: #{tpu_custom_call.1} parent=1 // pred_check
      _
    $region15: #{tpu_custom_call.1} parent=1 // pred_check_branch
      %74 = sbr.rel (%p71) target = $region17
    $region16: #{tpu_custom_call.1} parent=1 // pred_region
      %vm75 = vcmask 7168
      %76 = vst.msk [vmem:[#allocation5] sm:$0xff] %vm75, 0.0
      %77 = vst.msk [vmem:[#allocation5 + $0x8] sm:$0xff] %vm75, 0.0
      %78 = vst.msk [vmem:[#allocation5 + $0x10] sm:$0xff] %vm75, 0.0
      %79 = vst.msk [vmem:[#allocation5 + $0x18] sm:$0xff] %vm75, 0.0
    $region17: #{tpu_custom_call.1} parent=1 // pred_fallthru
      _
    // Predicated region
    $region18: #{tpu_custom_call.1} parent=1 // pred_check
      %p80 = pneg %p70
    $region19: #{tpu_custom_call.1} parent=1 // pred_check_branch
      %82 = sbr.rel (%p80) target = $region21
    $region20: #{tpu_custom_call.1} parent=1 // pred_region
      %vm83 = vcmask 7168
      %84 = vst.msk [vmem:[#allocation2] sm:$0xff] %vm83, -1e+30
      %85 = vst.msk [vmem:[#allocation2 + $0x8] sm:$0xff] %vm83, -1e+30
      %86 = vst.msk [vmem:[#allocation2 + $0x10] sm:$0xff] %vm83, -1e+30
      %87 = vst.msk [vmem:[#allocation2 + $0x18] sm:$0xff] %vm83, -1e+30
      %88 = vst.msk [vmem:[#allocation3] sm:$0xff] %vm83, 0.0
      %89 = vst.msk [vmem:[#allocation3 + $0x8] sm:$0xff] %vm83, 0.0
      %90 = vst.msk [vmem:[#allocation3 + $0x10] sm:$0xff] %vm83, 0.0
      %91 = vst.msk [vmem:[#allocation3 + $0x18] sm:$0xff] %vm83, 0.0
      %92 = vst.msk [vmem:[#allocation4] sm:$0xff] %vm83, 0.0
      %93 = vst.msk [vmem:[#allocation4 + $0x8] sm:$0xff] %vm83, 0.0
      %94 = vst.msk [vmem:[#allocation4 + $0x10] sm:$0xff] %vm83, 0.0
      %95 = vst.msk [vmem:[#allocation4 + $0x18] sm:$0xff] %vm83, 0.0
    $region21: #{tpu_custom_call.1} parent=1 // pred_fallthru
      _
    %v96 = vld [vmem:[#allocation6] sm:$0xff]
    %v97 = vld [vmem:[#allocation6 + $0x8] sm:$0xff]
    %v98 = vld [vmem:[#allocation6 + $0x10] sm:$0xff]
    %v99 = vld [vmem:[#allocation6 + $0x18] sm:$0xff]
    %v100 = vld [vmem:[#allocation6 + $0x20] sm:$0xff]
    %v101 = vld [vmem:[#allocation6 + $0x28] sm:$0xff]
    %v102 = vld [vmem:[#allocation6 + $0x30] sm:$0xff]
    %v103 = vld [vmem:[#allocation6 + $0x38] sm:$0xff]
    %v104 = vld [vmem:[%s64] sm:$0xff]
    %v105 = vld [vmem:[%s64 + $0x8] sm:$0xff]
    %v106 = vld [vmem:[%s64 + $0x10] sm:$0xff]
    %v107 = vld [vmem:[%s64 + $0x18] sm:$0xff]
    %s108 = smul.u32 0, 200
    %v109 = vlaneseq
    %v110 = vand.u32 %v109, 127
    %v111 = vadd.s32 %v110, 128
    %v112 = vstv %s108
    %v113 = vadd.s32 %v112, %v110
    %v114 = vadd.s32 %v112, %v111
    %v115 = vld [vmem:[#allocation4] sm:$0xff]
    %v116 = vld [vmem:[#allocation4 + $0x8] sm:$0xff]
    %v117 = vld [vmem:[#allocation4 + $0x10] sm:$0xff]
    %v118 = vld [vmem:[#allocation4 + $0x18] sm:$0xff]
    %119 = vset.pattern.permute.xlu0 0
    %120 = vperm.xlu0 %119, %v104
    %v121 = vpop.permute.xlu0 %120
    %122 = vset.pattern.permute.xlu0 0
    %123 = vperm.xlu0 %122, %v105
    %v124 = vpop.permute.xlu0 %123
    %125 = vset.pattern.permute.xlu0 0
    %126 = vperm.xlu0 %125, %v106
    %v127 = vpop.permute.xlu0 %126
    %128 = vset.pattern.permute.xlu0 0
    %129 = vperm.xlu0 %128, %v107
    %v130 = vpop.permute.xlu0 %129
    %vm131 = vcmp.eq.s32.totalorder %v113, %v121
    %vm132 = vcmp.eq.s32.totalorder %v114, %v121
    %vm133 = vcmp.eq.s32.totalorder %v113, %v124
    %vm134 = vcmp.eq.s32.totalorder %v114, %v124
    %vm135 = vcmp.eq.s32.totalorder %v113, %v127
    %vm136 = vcmp.eq.s32.totalorder %v114, %v127
    %vm137 = vcmp.eq.s32.totalorder %v113, %v130
    %vm138 = vcmp.eq.s32.totalorder %v114, %v130
    %v139 = vsel %vm131, %v96, 0.0
    %v140 = vsel %vm132, %v97, 0.0
    %v141 = vsel %vm133, %v98, 0.0
    %v142 = vsel %vm134, %v99, 0.0
    %v143 = vsel %vm135, %v100, 0.0
    %v144 = vsel %vm136, %v101, 0.0
    %v145 = vsel %vm137, %v102, 0.0
    %v146 = vsel %vm138, %v103, 0.0
    %vm147 = vcmask 588800
    %v148 = vsel %vm147, %v140, 0.0
    %v149 = vadd.f32 %v139, %v148
    %150 = vadd.xlane.f32.xlu0 %v149
    %v151 = vpop.xlane.xlu0 %150
    %v152 = vsel %vm147, %v142, 0.0
    %v153 = vadd.f32 %v141, %v152
    %154 = vadd.xlane.f32.xlu0 %v153
    %v155 = vpop.xlane.xlu0 %154
    %v156 = vsel %vm147, %v144, 0.0
    %v157 = vadd.f32 %v143, %v156
    %158 = vadd.xlane.f32.xlu0 %v157
    %v159 = vpop.xlane.xlu0 %158
    %v160 = vsel %vm147, %v146, 0.0
    %v161 = vadd.f32 %v145, %v160
    %162 = vadd.xlane.f32.xlu0 %v161
    %v163 = vpop.xlane.xlu0 %162
    %v164 = vadd.f32 %v115, %v151
    %v165 = vadd.f32 %v116, %v155
    %v166 = vadd.f32 %v117, %v159
    %v167 = vadd.f32 %v118, %v163
    %vm168 = vcmask 7168
    %169 = vst.msk [vmem:[#allocation4] sm:$0xff] %vm168, %v164
    %170 = vst.msk [vmem:[#allocation4 + $0x8] sm:$0xff] %vm168, %v165
    %171 = vst.msk [vmem:[#allocation4 + $0x10] sm:$0xff] %vm168, %v166
    %172 = vst.msk [vmem:[#allocation4 + $0x18] sm:$0xff] %vm168, %v167
    %v173 = vld [vmem:[#allocation2] sm:$0xff]
    %v174 = vld [vmem:[#allocation2 + $0x8] sm:$0xff]
    %v175 = vld [vmem:[#allocation2 + $0x10] sm:$0xff]
    %v176 = vld [vmem:[#allocation2 + $0x18] sm:$0xff]
    %v177 = vsel %vm147, %v97, -inf
    %v178 = vmax.f32 %v96, %v177
    %179 = vmax.xlane.f32.xlu0 %v178
    %v180 = vpop.xlane.xlu0 %179
    %v181 = vsel %vm147, %v99, -inf
    %v182 = vmax.f32 %v98, %v181
    %183 = vmax.xlane.f32.xlu0 %v182
    %v184 = vpop.xlane.xlu0 %183
    %v185 = vsel %vm147, %v101, -inf
    %v186 = vmax.f32 %v100, %v185
    %187 = vmax.xlane.f32.xlu0 %v186
    %v188 = vpop.xlane.xlu0 %187
    %v189 = vsel %vm147, %v103, -inf
    %v190 = vmax.f32 %v102, %v189
    %191 = vmax.xlane.f32.xlu0 %v190
    %v192 = vpop.xlane.xlu0 %191
    %v193 = vmax.f32 %v173, %v180
    %v194 = vmax.f32 %v174, %v184
    %v195 = vmax.f32 %v175, %v188
    %v196 = vmax.f32 %v176, %v192
    %v197 = vld [vmem:[#allocation3] sm:$0xff]
    %v198 = vld [vmem:[#allocation3 + $0x8] sm:$0xff]
    %v199 = vld [vmem:[#allocation3 + $0x10] sm:$0xff]
    %v200 = vld [vmem:[#allocation3 + $0x18] sm:$0xff]
    %v201 = vsub.f32 %v173, %v193
    %v202 = vsub.f32 %v174, %v194
    %v203 = vsub.f32 %v175, %v195
    %v204 = vsub.f32 %v176, %v196
    %v205 = vmul.f32 %v201, 1.442695
    %v206 = vpow.pop %v205
    %v207 = vmul.f32 %v202, 1.442695
    %v208 = vpow.pop %v207
    %v209 = vmul.f32 %v203, 1.442695
    %v210 = vpow.pop %v209
    %v211 = vmul.f32 %v204, 1.442695
    %v212 = vpow.pop %v211
    %v213 = vmul.f32 %v197, %v206
    %v214 = vmul.f32 %v198, %v208
    %v215 = vmul.f32 %v199, %v210
    %v216 = vmul.f32 %v200, %v212
    %218 = vset.pattern.permute.xlu0 0
    %219 = vperm.xlu0 %218, %v193
    %v220 = vpop.permute.xlu0 %219
    %223 = vset.pattern.permute.xlu0 0
    %224 = vperm.xlu0 %223, %v194
    %v225 = vpop.permute.xlu0 %224
    %228 = vset.pattern.permute.xlu0 0
    %229 = vperm.xlu0 %228, %v195
    %v230 = vpop.permute.xlu0 %229
    %233 = vset.pattern.permute.xlu0 0
    %234 = vperm.xlu0 %233, %v196
    %v235 = vpop.permute.xlu0 %234
    %v237 = vsub.f32 %v96, %v220
    %v238 = vsub.f32 %v97, %v220
    %v239 = vsub.f32 %v98, %v225
    %v240 = vsub.f32 %v99, %v225
    %v241 = vsub.f32 %v100, %v230
    %v242 = vsub.f32 %v101, %v230
    %v243 = vsub.f32 %v102, %v235
    %v244 = vsub.f32 %v103, %v235
    %v245 = vmul.f32 %v237, 1.442695
    %v246 = vpow.pop %v245
    %v247 = vmul.f32 %v238, 1.442695
    %v248 = vpow.pop %v247
    %v249 = vmul.f32 %v239, 1.442695
    %v250 = vpow.pop %v249
    %v251 = vmul.f32 %v240, 1.442695
    %v252 = vpow.pop %v251
    %v253 = vmul.f32 %v241, 1.442695
    %v254 = vpow.pop %v253
    %v255 = vmul.f32 %v242, 1.442695
    %v256 = vpow.pop %v255
    %v257 = vmul.f32 %v243, 1.442695
    %v258 = vpow.pop %v257
    %v259 = vmul.f32 %v244, 1.442695
    %v260 = vpow.pop %v259
    %v261 = vsel %vm147, %v248, 0.0
    %v262 = vadd.f32 %v246, %v261
    %263 = vadd.xlane.f32.xlu0 %v262
    %v264 = vpop.xlane.xlu0 %263
    %v265 = vsel %vm147, %v252, 0.0
    %v266 = vadd.f32 %v250, %v265
    %267 = vadd.xlane.f32.xlu0 %v266
    %v268 = vpop.xlane.xlu0 %267
    %v269 = vsel %vm147, %v256, 0.0
    %v270 = vadd.f32 %v254, %v269
    %271 = vadd.xlane.f32.xlu0 %v270
    %v272 = vpop.xlane.xlu0 %271
    %v273 = vsel %vm147, %v260, 0.0
    %v274 = vadd.f32 %v258, %v273
    %275 = vadd.xlane.f32.xlu0 %v274
    %v276 = vpop.xlane.xlu0 %275
    %v277 = vadd.f32 %v213, %v264
    %v278 = vadd.f32 %v214, %v268
    %v279 = vadd.f32 %v215, %v272
    %v280 = vadd.f32 %v216, %v276
    %281 = vst.msk [vmem:[#allocation3] sm:$0xff] %vm168, %v277
    %282 = vst.msk [vmem:[#allocation3 + $0x8] sm:$0xff] %vm168, %v278
    %283 = vst.msk [vmem:[#allocation3 + $0x10] sm:$0xff] %vm168, %v279
    %284 = vst.msk [vmem:[#allocation3 + $0x18] sm:$0xff] %vm168, %v280
    %285 = vst.msk [vmem:[#allocation2] sm:$0xff] %vm168, %v193
    %286 = vst.msk [vmem:[#allocation2 + $0x8] sm:$0xff] %vm168, %v194
    %287 = vst.msk [vmem:[#allocation2 + $0x10] sm:$0xff] %vm168, %v195
    %288 = vst.msk [vmem:[#allocation2 + $0x18] sm:$0xff] %vm168, %v196
    // Predicated region
    $region22: #{tpu_custom_call.1} parent=1 // pred_check
      %p289 = pneg %p70
    $region23: #{tpu_custom_call.1} parent=1 // pred_check_branch
      %291 = sbr.rel (%p289) target = $region25
    $region24: #{tpu_custom_call.1} parent=1 // pred_region
      %v292 = vld [vmem:[#allocation2] sm:$0xff]
      %v293 = vld [vmem:[#allocation2 + $0x8] sm:$0xff]
      %v294 = vld [vmem:[#allocation2 + $0x10] sm:$0xff]
      %v295 = vld [vmem:[#allocation2 + $0x18] sm:$0xff]
      %v296 = vld [vmem:[#allocation3] sm:$0xff]
      %v297 = vld [vmem:[#allocation3 + $0x8] sm:$0xff]
      %v298 = vld [vmem:[#allocation3 + $0x10] sm:$0xff]
      %v299 = vld [vmem:[#allocation3 + $0x18] sm:$0xff]
      %v300 = vlog2.pop %v296
      %v301 = vmul.f32 %v300, 0.6931472
      %v302 = vlog2.pop %v297
      %v303 = vmul.f32 %v302, 0.6931472
      %v304 = vlog2.pop %v298
      %v305 = vmul.f32 %v304, 0.6931472
      %v306 = vlog2.pop %v299
      %v307 = vmul.f32 %v306, 0.6931472
      %v308 = vadd.f32 %v292, %v301
      %v309 = vadd.f32 %v293, %v303
      %v310 = vadd.f32 %v294, %v305
      %v311 = vadd.f32 %v295, %v307
      %v312 = vld [vmem:[#allocation4] sm:$0xff]
      %v313 = vld [vmem:[#allocation4 + $0x8] sm:$0xff]
      %v314 = vld [vmem:[#allocation4 + $0x10] sm:$0xff]
      %v315 = vld [vmem:[#allocation4 + $0x18] sm:$0xff]
      %v316 = vsub.f32 %v308, %v312
      %v317 = vsub.f32 %v309, %v313
      %v318 = vsub.f32 %v310, %v314
      %v319 = vsub.f32 %v311, %v315
      %v320 = vmin.f32 %v316, 16.118095
      %v321 = vmin.f32 %v317, 16.118095
      %v322 = vmin.f32 %v318, 16.118095
      %v323 = vmin.f32 %v319, 16.118095
      %v324 = vmul.f32 %v316, 0.1
      %v325 = vmul.f32 %v317, 0.1
      %v326 = vmul.f32 %v318, 0.1
      %v327 = vmul.f32 %v319, 0.1
      %v328 = vadd.f32 %v324, %v320
      %v329 = vadd.f32 %v325, %v321
      %v330 = vadd.f32 %v326, %v322
      %v331 = vadd.f32 %v327, %v323
      %s332 = sadd.s32 0, 0
      %s333 = smul.u32 %s332, 32
      %v334 = vlaneseq
      %v335 = vshrl.u32 %v334, 7
      %v336 = vadd.s32 %v335, 8
      %v337 = vadd.s32 %v335, 16
      %v338 = vadd.s32 %v335, 24
      %v339 = vstv %s333
      %v340 = vadd.s32 %v339, %v335
      %v341 = vadd.s32 %v339, %v336
      %v342 = vadd.s32 %v339, %v337
      %v343 = vadd.s32 %v339, %v338
      %vm344 = vcmp.lt.s32.totalorder %v340, 30
      %vm345 = vcmp.lt.s32.totalorder %v341, 30
      %vm346 = vcmp.lt.s32.totalorder %v342, 30
      %vm347 = vcmp.lt.s32.totalorder %v343, 30
      %v348 = vsel %vm344, %v328, 0.0
      %v349 = vsel %vm345, %v329, 0.0
      %v350 = vsel %vm346, %v330, 0.0
      %v351 = vsel %vm347, %v331, 0.0
      %v352 = vld [vmem:[#allocation5] sm:$0xff]
      %v353 = vld [vmem:[#allocation5 + $0x8] sm:$0xff]
      %v354 = vld [vmem:[#allocation5 + $0x10] sm:$0xff]
      %v355 = vld [vmem:[#allocation5 + $0x18] sm:$0xff]
      %v356 = vadd.f32 %v352, %v348
      %v357 = vadd.f32 %v353, %v349
      %v358 = vadd.f32 %v354, %v350
      %v359 = vadd.f32 %v355, %v351
      %360 = vst.msk [vmem:[#allocation5] sm:$0xff] %vm168, %v356
      %361 = vst.msk [vmem:[#allocation5 + $0x8] sm:$0xff] %vm168, %v357
      %362 = vst.msk [vmem:[#allocation5 + $0x10] sm:$0xff] %vm168, %v358
      %363 = vst.msk [vmem:[#allocation5 + $0x18] sm:$0xff] %vm168, %v359
    $region25: #{tpu_custom_call.1} parent=1 // pred_fallthru
      _
    // Predicated region
    $region26: #{tpu_custom_call.1} parent=1 // pred_check
      _
    $region27: #{tpu_custom_call.1} parent=1 // pred_check_branch
      %365 = sbr.rel (%p71) target = $region29
    $region28: #{tpu_custom_call.1} parent=1 // pred_region
      %v366 = vld [vmem:[#allocation5] sm:$0xff]
      %v367 = vld [vmem:[#allocation5 + $0x8] sm:$0xff]
      %v368 = vld [vmem:[#allocation5 + $0x10] sm:$0xff]
      %v369 = vld [vmem:[#allocation5 + $0x18] sm:$0xff]
      %v370 = vsel %vm168, %v366, 0.0
      %v371 = vsel %vm168, %v367, 0.0
      %v372 = vadd.f32 %v370, %v371
      %v373 = vsel %vm168, %v368, 0.0
      %v374 = vadd.f32 %v372, %v373
      %v375 = vsel %vm168, %v369, 0.0
      %v376 = vadd.f32 %v374, %v375
      %377 = vadd.xlane.f32.xlu0 %v376
      %v378 = vpop.xlane.xlu0 %377
      %v379 = vrot.slane %v378, 4
      %v380 = vadd.f32 %v378, %v379
      %v381 = vrot.slane %v380, 2
      %v382 = vadd.f32 %v380, %v381
      %v383 = vrot.slane %v382, 1
      %v384 = vadd.f32 %v382, %v383
      %s385 = vtos %v384
      %v386 = vstv %s385
      %vm387 = vcmask 0
      %388 = vst.msk [vmem:[#allocation9] sm:$0x1] %vm387, %v386
    $region29: #{tpu_custom_call.1} parent=1 // pred_fallthru
      _
    // Predicated region
    $region30: #{tpu_custom_call.1} parent=1 // pred_check
      _
    $region31: #{tpu_custom_call.1} parent=1 // pred_check_branch
      %390 = sbr.rel (0) target = $region33
    $region32: #{tpu_custom_call.1} parent=1 // pred_region
      %s392 = ssub.s32 16, 16
      %393 = vsyncadd [#allocation8], %s392
      %s395 = sshll.u32 [#allocation9], 4
      %s396 = int_to_ptr.vmem [resolvable:$true] %s395
      %398 = dma.vmem_to_hbm [thread:$0]  %s396, 16, %s2, [#allocation8]
    $region33: #{tpu_custom_call.1} parent=1 // pred_fallthru
      _
    // Predicated region
    $region34: #{tpu_custom_call.1} parent=1 // pred_check
      _
    $region35: #{tpu_custom_call.1} parent=1 // pred_check_branch
      %400 = sbr.rel (0) target = $region37
    $region36: #{tpu_custom_call.1} parent=1 // pred_region
      %401 = dma.done [#allocation8], 16
    $region37: #{tpu_custom_call.1} parent=1 // pred_fallthru
      _
    %402 = vsyncpa [#allocation7], 1
    %403 = vsyncpa [#allocation8], 1

</llo_original>
